<compile_context>
chip_gen: v7x
topology: tpu7x:2x2x1
jax: 0.10.0
libtpu: 0.0.40
codegen_flags: <defaults>
</compile_context>

<pallas_src>
import math

import jax
import jax.numpy as jnp
from jax.experimental import pallas as pl
from jax.experimental.pallas import tpu as pltpu

_BLOCK_BYTES = 6 * 1024 * 1024   # per-block budget (applies to in and out blocks)
_VMEM_LIMIT = 48 * 1024 * 1024   # explicit scoped-VMEM limit (covers 2*(in+out+pe))
_LANE = 128
_SUBLANE = 8


def _add_pe_kernel(x_ref, pe_ref, o_ref):
    # x_ref : (tile_r, tile_c) in x's dtype
    # pe_ref: (1, tile_c) or (tile_r, tile_c) in the output dtype
    # o_ref : (tile_r, tile_c) in the output (promoted) dtype
    # Single vld / (cast) / vadd / vst stream; the cast rides the VPU for free
    # under a memory-bound add.
    o_ref[...] = x_ref[...].astype(o_ref.dtype) + pe_ref[...]


def _divisors(n: int):
    small, large = [], []
    d = 1
    while d * d <= n:
        if n % d == 0:
            small.append(d)
            if d != n // d:
                large.append(n // d)
        d += 1
    return small + large[::-1]  # ascending


def _pick_row_tile(rows: int, cap: int, multiple_of: int = 1) -> int:
    """Largest divisor of `rows` <= cap that is a multiple of `multiple_of`,
    preferring sublane-aligned (x8) tiles or the full extent (legal block dims)."""
    aligned, any_div = None, None
    for d in _divisors(rows):
        if d > cap or d % multiple_of:
            continue
        any_div = d
        if d == rows or d % _SUBLANE == 0:
            aligned = d
    if aligned is not None:
        return aligned
    return any_div if any_div is not None else multiple_of


def _pick_lane_tile(cols: int, cap: int) -> int:
    """Full width if it fits the budget; else the largest 128-multiple divisor <= cap."""
    if cols <= cap:
        return cols
    best = _LANE
    for d in _divisors(cols):
        if d <= cap and d % _LANE == 0:
            best = max(best, d)
    return best


def _pick_seq_fold(batch: int, seq: int, d_model: int, rows_floor: int,
                   max_block_elems: int) -> int:
    """Smallest factor of seq to fold into the row axis so rows >= the sublane
    floor, while keeping the lane axis a 128 multiple and one pe period inside a
    block.  Returns 1 (no fold) when batch alone is big enough or nothing works."""
    if batch >= rows_floor:
        return 1
    for sr in _divisors(seq):
        if sr == 1:
            continue
        lanes = (seq // sr) * d_model
        if lanes % _LANE:
            continue
        if batch * sr < rows_floor:
            continue
        if sr * lanes > max_block_elems:
            continue
        return sr
    return 1


def positional_encoding(x: jax.Array, emb_table: jax.Array, *,
                        donate_x: bool = False) -> jax.Array:
    """x: (..., seq, d_model); emb_table: (num_positions, d_model)."""
    *lead, seq, d_model = x.shape
    num_positions, d_model_e = emb_table.shape
    if d_model_e != d_model:
        raise ValueError(f"d_model mismatch: x has {d_model}, table has {d_model_e}")
    if seq > num_positions:
        # nn.Embedding would raise an index error; fail loudly here too.
        raise ValueError(f"seq={seq} exceeds num_positions={num_positions}")

    batch = math.prod(lead) if lead else 1
    out_dtype = jnp.promote_types(x.dtype, emb_table.dtype)   # PyTorch promotion
    x_item = jnp.dtype(x.dtype).itemsize
    itemsize = max(x_item, jnp.dtype(out_dtype).itemsize)
    max_block_elems = max(_BLOCK_BYTES // itemsize, _SUBLANE * _LANE)
    rows_floor = _SUBLANE * max(1, 4 // x_item)   # 8 f32 / 16 bf16 / 32 int8

    # Positional slice emb(arange(seq)), pre-cast to the output dtype (tiny array).
    pe = jax.lax.slice(emb_table, (0, 0), (seq, d_model)).astype(out_dtype)

    sr = _pick_seq_fold(batch, seq, d_model, rows_floor, max_block_elems)

    if sr > 1:
        # ---- Layout B: fold `sr` sequence steps into the row axis -------------
        rows = batch * sr
        n_cols = (seq // sr) * d_model        # 128-multiple by construction
        valid_cols = n_cols
        x2d = x.reshape(rows, n_cols)
        tile_c = n_cols                        # one pe period fits -> full width
        tile_r = _pick_row_tile(rows, max(sr, max_block_elems // n_cols),
                                multiple_of=sr)
        # Every row block needs the same (tile_r // sr) repetitions of the sr
        # positional rows -> pre-tile once; the pe block is VMEM-resident.
        pe_arg = jnp.tile(pe.reshape(sr, n_cols), (tile_r // sr, 1))
        grid = (rows // tile_r,)
        in_specs = [
            pl.BlockSpec((tile_r, tile_c), lambda i: (i, 0)),
            pl.BlockSpec((tile_r, tile_c), lambda i: (0, 0)),
        ]
        out_specs = pl.BlockSpec((tile_r, tile_c), lambda i: (i, 0))
        semantics = ("parallel",)
    else:
        # ---- Layout A: (batch, seq*d_model), pe is one broadcast row ----------
        rows = batch
        valid_cols = seq * d_model
        pad_c = (-valid_cols) % _LANE          # lane-dense (unmasked) stores
        n_cols = valid_cols + pad_c
        x2d = x.reshape(rows, valid_cols)
        pe_arg = pe.reshape(1, valid_cols)
        if pad_c:
            # Costs one extra pass over x in XLA but avoids masked vst.msk stores.
            x2d = jnp.pad(x2d, ((0, 0), (0, pad_c)))
            pe_arg = jnp.pad(pe_arg, ((0, 0), (0, pad_c)))
        tile_c = _pick_lane_tile(n_cols, max_block_elems)
        tile_r = _pick_row_tile(rows, max(1, max_block_elems // tile_c))
        # Row axis innermost: the pe block index is constant across it, so the pe
        # tile stays resident in VMEM per lane tile (no re-DMA).
        grid = (n_cols // tile_c, rows // tile_r)
        in_specs = [
            pl.BlockSpec((tile_r, tile_c), lambda c, r: (r, c)),
            pl.BlockSpec((1, tile_c), lambda c, r: (0, c)),
        ]
        out_specs = pl.BlockSpec((tile_r, tile_c), lambda c, r: (r, c))
        semantics = ("parallel", "parallel")

    cost = pl.CostEstimate(
        flops=rows * n_cols,
        transcendentals=0,
        bytes_accessed=x2d.size * x2d.dtype.itemsize
        + pe_arg.size * pe_arg.dtype.itemsize
        + rows * n_cols * jnp.dtype(out_dtype).itemsize,
    )

    io_aliases = {}
    if donate_x and x2d.dtype == out_dtype and x2d.shape == (rows, n_cols):
        io_aliases = {0: 0}   # write in place when the caller donates x

    out2d = pl.pallas_call(
        _add_pe_kernel,
        out_shape=jax.ShapeDtypeStruct((rows, n_cols), out_dtype),
        grid=grid,
        in_specs=in_specs,
        out_specs=out_specs,
        input_output_aliases=io_aliases,
        cost_estimate=cost,
        compiler_params=pltpu.CompilerParams(
            dimension_semantics=semantics,
            vmem_limit_bytes=_VMEM_LIMIT,
        ),
    )(x2d, pe_arg)

    if n_cols != valid_cols:
        out2d = out2d[:, :valid_cols]
    return out2d.reshape(x.shape)


if __name__ == "__main__":
    key = jax.random.PRNGKey(0)

    # Case 1: the module's toy configuration (batch-major layout, single block).
    d_model, num_positions = 32, 20
    batch, seq = 2, 8
    k_x, k_emb, key = jax.random.split(key, 3)
    emb_table = jax.random.normal(k_emb, (num_positions, d_model), dtype=jnp.float32)
    x = jax.random.normal(k_x, (batch, seq, d_model), dtype=jnp.float32)
    out = jax.block_until_ready(positional_encoding(x, emb_table))
    ref = x + emb_table[:seq][None, :, :]
    assert out.shape == x.shape and out.dtype == jnp.float32
    assert jnp.allclose(out, ref, atol=1e-6), "mismatch vs reference (case 1)"

    # Case 2: small batch -> seq folded into the row axis (8 full sublanes,
    # 640-lane blocks, pe tiled and resident).
    d_model2, num_positions2 = 64, 20
    batch2, seq2 = 4, 20
    k_x2, k_emb2, key = jax.random.split(key, 3)
    emb_table2 = jax.random.normal(k_emb2, (num_positions2, d_model2), dtype=jnp.float32)
    x2 = jax.random.normal(k_x2, (batch2, seq2, d_model2), dtype=jnp.float32)
    out2 = jax.block_until_ready(positional_encoding(x2, emb_table2))
    ref2 = x2 + emb_table2[:seq2][None, :, :]
    assert jnp.allclose(out2, ref2, atol=1e-6), "mismatch vs reference (case 2)"

    # Case 3: mixed dtypes (bf16 activations + f32 table) -> promoted f32 output,
    # matching PyTorch type promotion.
    k_x3, key = jax.random.split(key)
    x3 = jax.random.normal(k_x3, (16, seq2, d_model2), dtype=jnp.bfloat16)
    out3 = jax.block_until_ready(positional_encoding(x3, emb_table2))
    ref3 = x3.astype(jnp.float32) + emb_table2[:seq2][None, :, :]
    assert out3.dtype == jnp.float32, "promotion to f32 expected"
    assert jnp.allclose(out3, ref3, atol=1e-6), "mismatch vs reference (case 3)"

    # Case 4: larger shape exercising the multi-step pipelined grid with
    # full-width ~4 MiB contiguous blocks (16 MiB total).
    d_model4, seq4, batch4 = 128, 128, 256
    k_x4, k_emb4, key = jax.random.split(key, 3)
    emb_table4 = jax.random.normal(k_emb4, (seq4, d_model4), dtype=jnp.float32)
    x4 = jax.random.normal(k_x4, (batch4, seq4, d_model4), dtype=jnp.float32)
    out4 = jax.block_until_ready(positional_encoding(x4, emb_table4))
    ref4 = x4 + emb_table4[:seq4][None, :, :]
    assert jnp.allclose(out4, ref4, atol=1e-6), "mismatch vs reference (case 4)"

    print("KERNEL_OK")
</pallas_src>

<mosaic_0001>
module attributes {stable_mosaic.version = 11 : i64} {
  func.func @_add_pe_kernel(%arg0: i32, %arg1: i32, %arg2: memref<2x256xf32, #tpu.memory_space<vmem>>, %arg3: memref<1x256xf32, #tpu.memory_space<vmem>>, %arg4: memref<2x256xf32, #tpu.memory_space<vmem>>) attributes {dimension_semantics = [#tpu.dimension_semantics<parallel>, #tpu.dimension_semantics<parallel>], iteration_bounds = array<i64: 1, 1>, scalar_prefetch = 0 : i64, scratch_operands = 0 : i64, tpu.core_type = #tpu.core_type<tc>, window_params = [{transform_indices = @transform_0, window_bounds = array<i64: 2, 256>}, {transform_indices = @transform_1, window_bounds = array<i64: 1, 256>}, {transform_indices = @transform_2, window_bounds = array<i64: 2, 256>}]} {
    %c0 = arith.constant 0 : index
    %c0_0 = arith.constant 0 : index
    %0 = vector.load %arg2[%c0, %c0_0] : memref<2x256xf32, #tpu.memory_space<vmem>>, vector<2x256xf32>
    %c0_1 = arith.constant 0 : index
    %c0_2 = arith.constant 0 : index
    %1 = vector.load %arg3[%c0_1, %c0_2] : memref<1x256xf32, #tpu.memory_space<vmem>>, vector<1x256xf32>
    %2 = vector.broadcast %1 : vector<1x256xf32> to vector<2x256xf32>
    %3 = arith.addf %0, %2 : vector<2x256xf32>
    %c0_3 = arith.constant 0 : index
    %c0_4 = arith.constant 0 : index
    %4 = vector.load %arg4[%c0_3, %c0_4] : memref<2x256xf32, #tpu.memory_space<vmem>>, vector<2x256xf32>
    tpu.vector_store %arg4[%c0_3, %c0_4], %3 {strides = array<i32>} : memref<2x256xf32, #tpu.memory_space<vmem>>, vector<2x256xf32>,
    return
  }
  func.func @transform_0(%arg0: i32, %arg1: i32) -> (i32, i32) {
    %c0_i32 = arith.constant 0 : i32
    return %arg1, %arg0 : i32, i32
  }
  func.func @transform_1(%arg0: i32, %arg1: i32) -> (i32, i32) {
    %c0_i32 = arith.constant 0 : i32
    %c0_i32_0 = arith.constant 0 : i32
    return %c0_i32, %arg0 : i32, i32
  }
  func.func @transform_2(%arg0: i32, %arg1: i32) -> (i32, i32) {
    %c0_i32 = arith.constant 0 : i32
    return %arg1, %arg0 : i32, i32
  }
}

</mosaic_0001>

<llo_original>
// kernel: tpu_custom_call.1
$region0: #{tpu_custom_call.1}
  #allocation0 [shape = 'u32[]', space=smem, size = 0x4, offset = 0x4, fixed_abs, tag = 'smem constant byte address 0x4 - core index']
  #allocation1 [shape = 'u32[144,128]{1,0:T(1,128)}', space=vmem, size = 0x12000, scoped, tag = 'internal scratch']
  %s0 = inlined_call_operand.hbm [shape: f32[2,256], index: 0, kind: input, shape index: {}]
  %s1 = inlined_call_operand.vmem [shape: f32[1,256], index: 1, kind: input, shape index: {}]
  %s2 = inlined_call_operand.hbm [shape: f32[2,256], index: 2, kind: output, shape index: {}]
  %s3 = sld [smem:[#allocation0]]
  $region22: #{tpu_custom_call.1} parent=0
    _
  %s5 = ssub.s32 1, %s3
  %s6 = scalar_select 0, %s5, %s3
  $region1: #{tpu_custom_call.1} parent=0
    #allocation2 [shape = 'u8[2048]{0}', space=vmem, size = 0x800, scoped, tag = 'input window, operand 0, single buffered']
    #allocation3 [shape = 's32[1]{0}', space=sflag, size = 0x4, scoped, tag = 'scoped memory for tpu_custom_call.1']
    #allocation4 [shape = 's32[1]{0}', space=sflag, size = 0x4, scoped, tag = 'scoped memory for tpu_custom_call.1']
    #allocation5 [shape = 'u8[2048]{0}', space=vmem, size = 0x800, scoped, tag = 'output window, operand 0, single buffered']
    %7 = vsyncpa [#allocation3], 0
    %8 = vsyncpa [#allocation4], 0
    // Predicated region
    $region2: #{tpu_custom_call.1} parent=1 // pred_check
      _
    $region3: #{tpu_custom_call.1} parent=1 // pred_check_branch
      %10 = sbr.rel (0) target = $region5
    $region4: #{tpu_custom_call.1} parent=1 // pred_region
      %s12 = ssub.s32 64, 64
      %13 = vsyncadd [#allocation3], %s12
      %s15 = sshll.u32 [#allocation2], 4
      %s16 = int_to_ptr.vmem [resolvable:$true] %s15
      %18 = dma.hbm_to_vmem [thread:$0]  %s0, 64, %s16, [#allocation3]
    $region5: #{tpu_custom_call.1} parent=1 // pred_fallthru
      _
    // Predicated region
    $region6: #{tpu_custom_call.1} parent=1 // pred_check
      _
    $region7: #{tpu_custom_call.1} parent=1 // pred_check_branch
      %20 = sbr.rel (0) target = $region9
    $region8: #{tpu_custom_call.1} parent=1 // pred_region
      _
    $region9: #{tpu_custom_call.1} parent=1 // pred_fallthru
      _
    // Predicated region
    $region10: #{tpu_custom_call.1} parent=1 // pred_check
      _
    $region11: #{tpu_custom_call.1} parent=1 // pred_check_branch
      %22 = sbr.rel (0) target = $region13
    $region12: #{tpu_custom_call.1} parent=1 // pred_region
      %23 = dma.done [#allocation3], 64
    $region13: #{tpu_custom_call.1} parent=1 // pred_fallthru
      _
    %v24 = vld [vmem:[#allocation2] sm:$0xf]
    %v25 = vld [vmem:[%s1] sm:$0x3]
    %v27 = vlaneseq
    %v28 = vshrl.u32 %v27, 7
    %v29 = vsub.s32 0, %v28
    %v30 = vrot.slane %v25, %v29
    %v31 = vlaneseq
    %v32 = vshrl.u32 %v31, 7
    %v33 = vsub.s32 1, %v32
    %v34 = vrot.slane %v25, %v33
    %v35 = vcombine.low %v30, %v34
    %v37 = vunpack.c.l.s4 1983009808
    %v38 = vunpack.c.0.s8 %v37
    %v39 = vlaneseq
    %v40 = vshrl.u32 %v39, 7
    %v41 = vsub.s32 %v38, %v40
    %v42 = vrot.slane %v35, %v41
    %v44 = vadd.f32 %v24, %v42
    %45 = vst [vmem:[#allocation5] sm:$0xf] %v44
    // Predicated region
    $region14: #{tpu_custom_call.1} parent=1 // pred_check
      _
    $region15: #{tpu_custom_call.1} parent=1 // pred_check_branch
      %47 = sbr.rel (0) target = $region17
    $region16: #{tpu_custom_call.1} parent=1 // pred_region
      %s49 = ssub.s32 64, 64
      %50 = vsyncadd [#allocation4], %s49
      %s52 = sshll.u32 [#allocation5], 4
      %s53 = int_to_ptr.vmem [resolvable:$true] %s52
      %55 = dma.vmem_to_hbm [thread:$0]  %s53, 64, %s2, [#allocation4]
    $region17: #{tpu_custom_call.1} parent=1 // pred_fallthru
      _
    // Predicated region
    $region18: #{tpu_custom_call.1} parent=1 // pred_check
      _
    $region19: #{tpu_custom_call.1} parent=1 // pred_check_branch
      %57 = sbr.rel (0) target = $region21
    $region20: #{tpu_custom_call.1} parent=1 // pred_region
      %58 = dma.done [#allocation4], 64
    $region21: #{tpu_custom_call.1} parent=1 // pred_fallthru
      _
    %59 = vsyncpa [#allocation3], 1
    %60 = vsyncpa [#allocation4], 1

</llo_original>
